<compile_context>
chip_gen: v5e
topology: v5e:2x2
jax: 0.10.0
libtpu: 0.0.40
codegen_flags: <defaults>
</compile_context>

<pallas_src>
import functools

import jax
import jax.numpy as jnp
from jax.experimental import pallas as pl
from jax.experimental.pallas import tpu as pltpu


def _regular_ce_kernel(x_ref, t_ref, sum_ref, cnt_ref, *,
                       ignore_index, hw, tile_pixels, p_inner, mask_tail):
    pi = pl.program_id(2)

    @pl.when(pi == 0)
    def _():
        sum_ref[...] = jnp.zeros_like(sum_ref)
        cnt_ref[...] = jnp.zeros_like(cnt_ref)

    x = x_ref[0].astype(jnp.float32)        # (C, TP) channels on sublanes, pixels on lanes
    t = t_ref[0]                            # (1, TP) int32 targets
    num_classes = x.shape[0]

    # logsumexp over channels (sublane reduce), single exp pass
    m = jnp.max(x, axis=0, keepdims=True)                                # (1, TP)
    e = jnp.exp(x - m)                                                   # (C, TP)
    lse = m + jnp.log(jnp.sum(e, axis=0, keepdims=True))                 # (1, TP)

    # gather x[target] via a (C,1) channel iota broadcast against (1,TP) targets
    ch = jax.lax.broadcasted_iota(jnp.int32, (num_classes, 1), 0)        # (C, 1)
    gathered = jnp.sum(jnp.where(ch == t, x, 0.0), axis=0, keepdims=True)  # (1, TP)

    nll = lse - gathered                                                 # (1, TP)
    valid = t != ignore_index                                            # (1, TP)
    if mask_tail:  # static: only emitted when the pixel coverage overshoots HW
        chunk = pl.program_id(1) * p_inner + pi
        pix = chunk * tile_pixels + jax.lax.broadcasted_iota(
            jnp.int32, (1, tile_pixels), 1)
        valid = valid & (pix < hw)

    sum_ref[...] += jnp.where(valid, nll, 0.0)[None, None]               # (1, 1, 1, TP)
    cnt_ref[...] += valid.astype(jnp.float32)[None, None]


def _vmem_budgets():
    """Generation-aware (total footprint budget, vmem_limit_bytes)."""
    cap = None
    try:
        info = pltpu.get_tpu_info()
        cap = int(getattr(info, "vmem_capacity_bytes"))
    except Exception:
        cap = None
    if cap is not None and cap >= 100 * 1024 * 1024:
        # v5e / v6e: 128 MiB physical VMEM -> go big.
        return 48 * 1024 * 1024, 64 * 1024 * 1024
    # v7x (64 MiB per TC) or unknown: stay conservative.
    return 24 * 1024 * 1024, 32 * 1024 * 1024


def regular_ce(logits, labels, ignore_index=255, weight=None,
               max_tile_pixels=None):
    """Masked-mean cross-entropy.

    logits: (N, C, H, W) float32 or bfloat16 (bf16 is streamed as-is; math in f32).
    labels: (N, H, W) integer.  Returns a scalar f32 loss.
    """
    # TODO(synk): per-class `weight` rescaling not implemented (module default weight=None).
    assert weight is None, "per-class weight not supported"

    N, C, H, W = logits.shape
    HW = H * W

    x = logits.reshape(N, C, HW)                       # free reshape, NCHW-native
    # TODO(synk): accept int16/uint8 labels with in-kernel upcast to shave HBM bytes at small C.
    t = labels.reshape(N, 1, HW).astype(jnp.int32)     # tiny array, lane-dense

    # ---- pixel tile: multiple of 128, sized to the generation-aware VMEM budget ----
    total_budget, vmem_limit = _vmem_budgets()
    itemsize = jnp.dtype(logits.dtype).itemsize
    pack = max(8, 32 // max(itemsize, 1))              # sublane packing: f32->8, bf16->16
    padded_c_in = -(-C // pack) * pack                 # sublane-padded channels (input dtype)
    padded_c_f32 = -(-C // 8) * 8                      # sublane-padded channels (f32 temps)
    per_pixel = (2 * padded_c_in * itemsize            # double-buffered logits blocks
                 + 3 * padded_c_f32 * 4                # f32 intermediates (cast, exp, select)
                 + 2 * 4                               # int32 targets (double-buffered)
                 + 4 * 4)                              # f32 sum/count accumulators
    cap_pixels = max(128, (total_budget // per_pixel) // 128 * 128)
    hw_pad = -(-HW // 128) * 128
    tp = int(min(cap_pixels, hw_pad))
    if max_tile_pixels is not None:
        tp = int(min(tp, max(128, (max_tile_pixels // 128) * 128)))

    # ---- pixel-chunk split: P_outer "parallel" x P_inner "arbitrary" ----
    p_total = -(-HW // tp)                             # number of real pixel chunks
    p_outer = 2 if p_total >= 2 else 1                 # lets v7x use both TensorCores at N=1
    p_inner = -(-p_total // p_outer)
    overshoot = p_outer * p_inner > p_total
    mask_tail = (p_outer * p_inner * tp) != HW         # ragged tail and/or overshoot chunk

    if overshoot:
        def pix_map(n, po, pi):                        # clamp: overshoot step re-reads last
            return (n, 0, jnp.minimum(po * p_inner + pi, p_total - 1))   # valid chunk (masked)
    else:
        def pix_map(n, po, pi):
            return (n, 0, po * p_inner + pi)

    kernel = functools.partial(
        _regular_ce_kernel, ignore_index=ignore_index, hw=HW,
        tile_pixels=tp, p_inner=p_inner, mask_tail=mask_tail)

    sums, cnts = pl.pallas_call(
        kernel,
        out_shape=(jax.ShapeDtypeStruct((N, p_outer, 1, tp), jnp.float32),
                   jax.ShapeDtypeStruct((N, p_outer, 1, tp), jnp.float32)),
        grid_spec=pltpu.PrefetchScalarGridSpec(
            num_scalar_prefetch=0,
            grid=(N, p_outer, p_inner),
            in_specs=[
                pl.BlockSpec((1, C, tp), pix_map),                    # logits slab
                pl.BlockSpec((1, 1, tp), pix_map),                    # lane-dense targets
            ],
            out_specs=(
                pl.BlockSpec((1, 1, 1, tp), lambda n, po, pi: (n, po, 0, 0)),  # partial sums
                pl.BlockSpec((1, 1, 1, tp), lambda n, po, pi: (n, po, 0, 0)),  # valid counts
            ),
        ),
        compiler_params=pltpu.CompilerParams(
            dimension_semantics=("parallel", "parallel", "arbitrary"),
            vmem_limit_bytes=vmem_limit,
        ),
    )(x, t)

    total = jnp.sum(sums)
    # Per-lane counts stay small (exact in f32); the global f32 sum loses integer
    # exactness only above ~16.7M valid pixels, negligible for the mean.
    count = jnp.sum(cnts)
    # RegularCE guard: if no valid pixels, the loss is 0.
    return jnp.where(count > 0, total / jnp.maximum(count, 1.0), 0.0)


def _reference_loss(logits, labels, ignore_index=255):
    """Pure-JAX mirror of RegularCE.forward (CE with ignore_index, masked mean)."""
    lse = jax.scipy.special.logsumexp(logits.astype(jnp.float32), axis=1)    # (N, H, W)
    x_nhwc = jnp.transpose(logits.astype(jnp.float32), (0, 2, 3, 1))
    safe = jnp.where(labels == ignore_index, 0, labels).astype(jnp.int32)
    gathered = jnp.take_along_axis(x_nhwc, safe[..., None], axis=-1)[..., 0]
    nll = lse - gathered
    valid = labels != ignore_index
    total = jnp.sum(jnp.where(valid, nll, 0.0))
    count = jnp.sum(valid.astype(jnp.float32))
    return jnp.where(count > 0, total / jnp.maximum(count, 1.0), 0.0)


if __name__ == "__main__":
    # RegularCE has no learnable parameters; ignore_label is a plain hyperparameter.
    IGNORE = 255
    key = jax.random.PRNGKey(0)

    def make_inputs(k, N, C, H, W):
        k_x, k_t, k_m = jax.random.split(k, 3)
        logits = jax.random.normal(k_x, (N, C, H, W), dtype=jnp.float32)
        labels = jax.random.randint(k_t, (N, H, W), 0, C, dtype=jnp.int32)
        ignore_mask = jax.random.uniform(k_m, (N, H, W)) < 0.1
        labels = jnp.where(ignore_mask, IGNORE, labels)
        return logits, labels

    k1, k2, k3 = jax.random.split(key, 3)

    # 1) Basic case (single chunk, no tail masking).
    logits, labels = make_inputs(k1, 2, 6, 16, 16)
    loss = jax.block_until_ready(regular_ce(logits, labels, IGNORE))
    ref = _reference_loss(logits, labels, IGNORE)
    assert jnp.allclose(loss, ref, rtol=1e-5, atol=1e-5), (loss, ref)

    # 2) HW not a multiple of 128 / smaller than the 128-lane block (ragged-tail path).
    logits, labels = make_inputs(k2, 2, 5, 9, 13)
    loss = jax.block_until_ready(regular_ce(logits, labels, IGNORE))
    ref = _reference_loss(logits, labels, IGNORE)
    assert jnp.allclose(loss, ref, rtol=1e-5, atol=1e-5), (loss, ref)

    # 3) Odd chunk count with forced small tiles: exercises the 2-way "parallel"
    #    pixel split, the clamped index_map and the fully-masked overshoot chunk.
    logits, labels = make_inputs(k3, 1, 4, 16, 24)
    loss = jax.block_until_ready(regular_ce(logits, labels, IGNORE, max_tile_pixels=128))
    ref = _reference_loss(logits, labels, IGNORE)
    assert jnp.allclose(loss, ref, rtol=1e-5, atol=1e-5), (loss, ref)

    # 4) All pixels ignored -> loss must be exactly 0 (mask.sum() == 0 guard).
    all_ignored = jnp.full((2, 16, 16), IGNORE, dtype=jnp.int32)
    logits0, _ = make_inputs(k1, 2, 6, 16, 16)
    loss0 = jax.block_until_ready(regular_ce(logits0, all_ignored, IGNORE))
    assert jnp.allclose(loss0, 0.0), loss0

    print("KERNEL_OK")
</pallas_src>

<mosaic_0001>
module attributes {stable_mosaic.version = 11 : i64} {
  func.func @_regular_ce_kernel(%arg0: i32, %arg1: i32, %arg2: i32, %arg3: memref<1x6x256xf32, #tpu.memory_space<vmem>>, %arg4: memref<1x1x256xi32, #tpu.memory_space<vmem>>, %arg5: memref<1x1x1x256xf32, #tpu.memory_space<vmem>>, %arg6: memref<1x1x1x256xf32, #tpu.memory_space<vmem>>) attributes {dimension_semantics = [#tpu.dimension_semantics<parallel>, #tpu.dimension_semantics<parallel>, #tpu.dimension_semantics<arbitrary>], iteration_bounds = array<i64: 2, 1, 1>, scalar_prefetch = 0 : i64, scratch_operands = 0 : i64, tpu.core_type = #tpu.core_type<tc>, window_params = [{transform_indices = @transform_0, window_bounds = array<i64: 1, 6, 256>}, {transform_indices = @transform_1, window_bounds = array<i64: 1, 1, 256>}, {transform_indices = @transform_2, window_bounds = array<i64: 1, 1, 1, 256>}, {transform_indices = @transform_3, window_bounds = array<i64: 1, 1, 1, 256>}]} {
    %c0_i32 = arith.constant 0 : i32
    %0 = arith.cmpi eq, %arg2, %c0_i32 : i32
    %1 = arith.extui %0 : i1 to i32
    %c0_i32_0 = arith.constant 0 : i32
    %2 = arith.cmpi ne, %1, %c0_i32_0 : i32
    scf.if %2 {
      %cst_26 = arith.constant 0.000000e+00 : f32
      %39 = vector.broadcast %cst_26 : f32 to vector<1x1x1x256xf32>
      %c0_27 = arith.constant 0 : index
      %c0_28 = arith.constant 0 : index
      %c0_29 = arith.constant 0 : index
      %c0_30 = arith.constant 0 : index
      %40 = vector.load %arg5[%c0_27, %c0_28, %c0_29, %c0_30] : memref<1x1x1x256xf32, #tpu.memory_space<vmem>>, vector<1x1x1x256xf32>
      tpu.vector_store %arg5[%c0_27, %c0_28, %c0_29, %c0_30], %39 {strides = array<i32>} : memref<1x1x1x256xf32, #tpu.memory_space<vmem>>, vector<1x1x1x256xf32>,
      %cst_31 = arith.constant 0.000000e+00 : f32
      %41 = vector.broadcast %cst_31 : f32 to vector<1x1x1x256xf32>
      %c0_32 = arith.constant 0 : index
      %c0_33 = arith.constant 0 : index
      %c0_34 = arith.constant 0 : index
      %c0_35 = arith.constant 0 : index
      %42 = vector.load %arg6[%c0_32, %c0_33, %c0_34, %c0_35] : memref<1x1x1x256xf32, #tpu.memory_space<vmem>>, vector<1x1x1x256xf32>
      tpu.vector_store %arg6[%c0_32, %c0_33, %c0_34, %c0_35], %41 {strides = array<i32>} : memref<1x1x1x256xf32, #tpu.memory_space<vmem>>, vector<1x1x1x256xf32>,
    } else {
    }
    %c0 = arith.constant 0 : index
    %c0_1 = arith.constant 0 : index
    %c0_2 = arith.constant 0 : index
    %3 = vector.load %arg3[%c0, %c0_1, %c0_2] : memref<1x6x256xf32, #tpu.memory_space<vmem>>, vector<1x6x256xf32>
    %4 = vector.shape_cast %3 : vector<1x6x256xf32> to vector<6x256xf32>
    %c0_3 = arith.constant 0 : index
    %c0_4 = arith.constant 0 : index
    %c0_5 = arith.constant 0 : index
    %5 = vector.load %arg4[%c0_3, %c0_4, %c0_5] : memref<1x1x256xi32, #tpu.memory_space<vmem>>, vector<1x1x256xi32>
    %6 = vector.shape_cast %5 : vector<1x1x256xi32> to vector<1x256xi32>
    %cst = arith.constant dense<0xFF800000> : vector<256xf32>
    %7 = vector.multi_reduction <maximumf>, %4, %cst [0] : vector<6x256xf32> to vector<256xf32>
    %8 = vector.shape_cast %7 : vector<256xf32> to vector<1x256xf32>
    %9 = vector.broadcast %8 : vector<1x256xf32> to vector<6x256xf32>
    %10 = arith.subf %4, %9 : vector<6x256xf32>
    %11 = math.exp %10 : vector<6x256xf32>
    %cst_6 = arith.constant dense<0.000000e+00> : vector<256xf32>
    %12 = vector.multi_reduction <add>, %11, %cst_6 [0] : vector<6x256xf32> to vector<256xf32>
    %13 = vector.shape_cast %12 : vector<256xf32> to vector<1x256xf32>
    %14 = math.log %13 : vector<1x256xf32>
    %15 = arith.addf %8, %14 : vector<1x256xf32>
    %16 = tpu.iota {dimensions = array<i32: 0>} : vector<6x1xi32>
    %17 = vector.broadcast %16 : vector<6x1xi32> to vector<6x256xi32>
    %18 = vector.broadcast %6 : vector<1x256xi32> to vector<6x256xi32>
    %19 = arith.cmpi eq, %17, %18 : vector<6x256xi32>
    %cst_7 = arith.constant 0.000000e+00 : f32
    %20 = vector.broadcast %cst_7 : f32 to vector<6x256xf32>
    %21 = arith.select %19, %4, %20 : vector<6x256xi1>, vector<6x256xf32>
    %cst_8 = arith.constant dense<0.000000e+00> : vector<256xf32>
    %22 = vector.multi_reduction <add>, %21, %cst_8 [0] : vector<6x256xf32> to vector<256xf32>
    %23 = vector.shape_cast %22 : vector<256xf32> to vector<1x256xf32>
    %24 = arith.subf %15, %23 : vector<1x256xf32>
    %c255_i32 = arith.constant 255 : i32
    %25 = vector.broadcast %c255_i32 : i32 to vector<1x256xi32>
    %26 = arith.cmpi ne, %6, %25 : vector<1x256xi32>
    %c0_9 = arith.constant 0 : index
    %c0_10 = arith.constant 0 : index
    %c0_11 = arith.constant 0 : index
    %c0_12 = arith.constant 0 : index
    %27 = vector.load %arg5[%c0_9, %c0_10, %c0_11, %c0_12] : memref<1x1x1x256xf32, #tpu.memory_space<vmem>>, vector<1x1x1x256xf32>
    %cst_13 = arith.constant 0.000000e+00 : f32
    %28 = vector.broadcast %cst_13 : f32 to vector<1x256xf32>
    %29 = arith.select %26, %24, %28 : vector<1x256xi1>, vector<1x256xf32>
    %30 = vector.shape_cast %29 : vector<1x256xf32> to vector<1x1x1x256xf32>
    %31 = arith.addf %27, %30 : vector<1x1x1x256xf32>
    %c0_14 = arith.constant 0 : index
    %c0_15 = arith.constant 0 : index
    %c0_16 = arith.constant 0 : index
    %c0_17 = arith.constant 0 : index
    %32 = vector.load %arg5[%c0_14, %c0_15, %c0_16, %c0_17] : memref<1x1x1x256xf32, #tpu.memory_space<vmem>>, vector<1x1x1x256xf32>
    tpu.vector_store %arg5[%c0_14, %c0_15, %c0_16, %c0_17], %31 {strides = array<i32>} : memref<1x1x1x256xf32, #tpu.memory_space<vmem>>, vector<1x1x1x256xf32>,
    %c0_18 = arith.constant 0 : index
    %c0_19 = arith.constant 0 : index
    %c0_20 = arith.constant 0 : index
    %c0_21 = arith.constant 0 : index
    %33 = vector.load %arg6[%c0_18, %c0_19, %c0_20, %c0_21] : memref<1x1x1x256xf32, #tpu.memory_space<vmem>>, vector<1x1x1x256xf32>
    %34 = arith.extui %26 : vector<1x256xi1> to vector<1x256xi32>
    %35 = arith.sitofp %34 : vector<1x256xi32> to vector<1x256xf32>
    %36 = vector.shape_cast %35 : vector<1x256xf32> to vector<1x1x1x256xf32>
    %37 = arith.addf %33, %36 : vector<1x1x1x256xf32>
    %c0_22 = arith.constant 0 : index
    %c0_23 = arith.constant 0 : index
    %c0_24 = arith.constant 0 : index
    %c0_25 = arith.constant 0 : index
    %38 = vector.load %arg6[%c0_22, %c0_23, %c0_24, %c0_25] : memref<1x1x1x256xf32, #tpu.memory_space<vmem>>, vector<1x1x1x256xf32>
    tpu.vector_store %arg6[%c0_22, %c0_23, %c0_24, %c0_25], %37 {strides = array<i32>} : memref<1x1x1x256xf32, #tpu.memory_space<vmem>>, vector<1x1x1x256xf32>,
    return
  }
  func.func @transform_0(%arg0: i32, %arg1: i32, %arg2: i32) -> (i32, i32, i32) {
    %c1_i32 = arith.constant 1 : i32
    %0 = arith.muli %arg1, %c1_i32 : i32
    %1 = arith.addi %0, %arg2 : i32
    %c0_i32 = arith.constant 0 : i32
    %c0_i32_0 = arith.constant 0 : i32
    return %arg0, %c0_i32, %1 : i32, i32, i32
  }
  func.func @transform_1(%arg0: i32, %arg1: i32, %arg2: i32) -> (i32, i32, i32) {
    %c1_i32 = arith.constant 1 : i32
    %0 = arith.muli %arg1, %c1_i32 : i32
    %1 = arith.addi %0, %arg2 : i32
    %c0_i32 = arith.constant 0 : i32
    %c0_i32_0 = arith.constant 0 : i32
    return %arg0, %c0_i32, %1 : i32, i32, i32
  }
  func.func @transform_2(%arg0: i32, %arg1: i32, %arg2: i32) -> (i32, i32, i32, i32) {
    %c0_i32 = arith.constant 0 : i32
    %c0_i32_0 = arith.constant 0 : i32
    %c0_i32_1 = arith.constant 0 : i32
    return %arg0, %arg1, %c0_i32, %c0_i32_0 : i32, i32, i32, i32
  }
  func.func @transform_3(%arg0: i32, %arg1: i32, %arg2: i32) -> (i32, i32, i32, i32) {
    %c0_i32 = arith.constant 0 : i32
    %c0_i32_0 = arith.constant 0 : i32
    %c0_i32_1 = arith.constant 0 : i32
    return %arg0, %arg1, %c0_i32, %c0_i32_0 : i32, i32, i32, i32
  }
}

</mosaic_0001>

<llo_original>
// kernel: tpu_custom_call.1
$region0: #{tpu_custom_call.1}
  #allocation0 [shape = 'u32[]', space=smem, size = 0x4, offset = 0x4, fixed_abs, tag = 'smem constant byte address 0x4 - core index']
  #allocation1 [shape = 'u32[72,128]{1,0:T(1,128)}', space=vmem, size = 0x9000, scoped, tag = 'internal scratch']
  %s0 = inlined_call_operand.vmem [shape: f32[2,6,256], index: 0, kind: input, shape index: {}]
  %s1 = inlined_call_operand.vmem [shape: s32[2,1,256], index: 1, kind: input, shape index: {}]
  %s2 = inlined_call_operand.hbm [shape: f32[2,1,1,256], index: 2, kind: output, shape index: {0}]
  %s3 = inlined_call_operand.hbm [shape: f32[2,1,1,256], index: 3, kind: output, shape index: {1}]
  %4 = xla_tuple %s2, %s3
  %s5 = sld [smem:[#allocation0]]
  $region53: #{tpu_custom_call.1} parent=0
    _
  %s7 = ssub.s32 1, %s5
  %s8 = scalar_select 0, %s7, %s5
  $region1: #{tpu_custom_call.1} parent=0
    #allocation2 [shape = 'u8[2048]{0}', space=vmem, size = 0x800, scoped, tag = 'output window, operand 0']
    #allocation3 [shape = 's32[2]{0}', space=sflag, size = 0x8, scoped, tag = 'scoped memory for tpu_custom_call.1']
    #allocation4 [shape = 'u8[2048]{0}', space=vmem, size = 0x800, scoped, tag = 'output window, operand 1']
    #allocation5 [shape = 's32[2]{0}', space=sflag, size = 0x8, scoped, tag = 'scoped memory for tpu_custom_call.1']
    %9 = vsyncpa [#allocation3], 0
    %s10 = scalar_lea.sflag [#allocation3], 1
    %11 = vsyncpa %s10, 0
    %12 = vsyncpa [#allocation5], 0
    %s13 = scalar_lea.sflag [#allocation5], 1
    %14 = vsyncpa %s13, 0
    loop: start=0, step=1, limit=4
    $region2: #{tpu_custom_call.1} parent=1 // loop_pre_header
      _
    $region3: #{tpu_custom_call.1} parent=1 // loop_header
      %s16 = sphi 0, %s20
      %p17 = scmp.ge.s32.totalorder %s16, 4
      %s23 = sphi 0, %s42
      %s24 = sphi 0, %s38
      %s25 = sphi 0, %s34
      %s26 = sphi 0, %s23
      %s27 = sphi 0, %s24
      %s28 = sphi 0, %s25
      %s29 = sphi 0, %s26
      %s30 = sphi 0, %s27
      %s31 = sphi 0, %s28
      %s49 = sphi 0, %s51
      %s52 = sphi 0, %s49
      %s53 = sphi 0, %s52
      %s69 = sphi 0, %s53
      %s79 = sphi 0, %s81
      %s82 = sphi 0, %s79
      %s83 = sphi 0, %s82
      %s99 = sphi 0, %s83
      %s107 = sphi 0, %s109
      %s110 = sphi 0, %s107
      %s111 = sphi 0, %s110
      %s127 = sphi 0, %s111
      %s135 = sphi 0, %s137
      %s138 = sphi 0, %s135
      %s139 = sphi 0, %s138
      %s155 = sphi 0, %s139
    $region4: #{tpu_custom_call.1} parent=1 // loop_header_branch
      %19 = sbr.rel (%p17) target = $region8
    $region5: #{tpu_custom_call.1} parent=1 // loop_body
      %s21 = ssub.s32 %s16, 1
      %s22 = ssub.s32 %s16, 2
      %s32 = sadd.s32 1, %s25
      %p33 = scmp.ge.s32.totalorder %s32, 1
      %s34 = scalar_select %p33, 0, %s32
      %s35 = sadd.s32 1, %s24
      %s36 = scalar_select %p33, %s35, %s24
      %p37 = scmp.ge.s32.totalorder %s36, 1
      %s38 = scalar_select %p37, 0, %s36
      %s39 = sadd.s32 1, %s23
      %s40 = scalar_select %p37, %s39, %s23
      %p41 = scmp.ge.s32.totalorder %s40, 2
      %s42 = scalar_select %p41, 0, %s40
      %s43 = sadd.s32 %s24, %s25
      %s44 = sadd.s32 %s38, %s34
      %s45 = ssub.s32 %s23, %s42
      %s46 = ssub.s32 %s43, %s44
      %s47 = sor.u32 %s45, %s46
      %p48 = scmp.eq.s32.totalorder %s47, 0
      %s50 = sadd.s32 %s49, 1
      %s51 = scalar_select %p48, %s49, %s50
      %p54 = pneg %p48
      %p55 = scmp.eq.s32.totalorder %s16, 1
      %p56 = por %p54, %p55
      %p57 = scmp.ne.s32.totalorder %s49, %s52
      %p58 = scmp.eq.s32.totalorder %s16, 0
      %p59 = por %p57, %p58
      %p60 = scmp.ne.s32.totalorder %s49, %s52
      %p61 = scmp.eq.s32.totalorder %s21, 1
      %p62 = por %p60, %p61
      %p63 = scmp.ne.s32.totalorder %s52, %s53
      %p64 = scmp.eq.s32.totalorder %s21, 0
      %p65 = por %p63, %p64
      %p66 = scmp.ne.s32.totalorder %s52, %s53
      %p67 = scmp.eq.s32.totalorder %s22, 1
      %p68 = por %p66, %p67
      %p70 = scmp.ne.s32.totalorder %s53, %s69
      %p71 = scmp.eq.s32.totalorder %s22, 0
      %p72 = por %p70, %p71
      %s73 = sadd.s32 %s24, %s25
      %s74 = sadd.s32 %s38, %s34
      %s75 = ssub.s32 %s23, %s42
      %s76 = ssub.s32 %s73, %s74
      %s77 = sor.u32 %s75, %s76
      %p78 = scmp.eq.s32.totalorder %s77, 0
      %s80 = sadd.s32 %s79, 1
      %s81 = scalar_select %p78, %s79, %s80
      %p84 = pneg %p78
      %p85 = scmp.eq.s32.totalorder %s16, 1
      %p86 = por %p84, %p85
      %p87 = scmp.ne.s32.totalorder %s79, %s82
      %p88 = scmp.eq.s32.totalorder %s16, 0
      %p89 = por %p87, %p88
      %p90 = scmp.ne.s32.totalorder %s79, %s82
      %p91 = scmp.eq.s32.totalorder %s21, 1
      %p92 = por %p90, %p91
      %p93 = scmp.ne.s32.totalorder %s82, %s83
      %p94 = scmp.eq.s32.totalorder %s21, 0
      %p95 = por %p93, %p94
      %p96 = scmp.ne.s32.totalorder %s82, %s83
      %p97 = scmp.eq.s32.totalorder %s22, 1
      %p98 = por %p96, %p97
      %p100 = scmp.ne.s32.totalorder %s83, %s99
      %p101 = scmp.eq.s32.totalorder %s22, 0
      %p102 = por %p100, %p101
      %s103 = ssub.s32 %s23, %s42
      %s104 = ssub.s32 %s24, %s38
      %s105 = sor.u32 %s103, %s104
      %p106 = scmp.eq.s32.totalorder %s105, 0
      %s108 = sadd.s32 %s107, 1
      %s109 = scalar_select %p106, %s107, %s108
      %p112 = pneg %p106
      %p113 = scmp.eq.s32.totalorder %s16, 1
      %p114 = por %p112, %p113
      %p115 = scmp.ne.s32.totalorder %s107, %s110
      %p116 = scmp.eq.s32.totalorder %s16, 0
      %p117 = por %p115, %p116
      %p118 = scmp.ne.s32.totalorder %s107, %s110
      %p119 = scmp.eq.s32.totalorder %s21, 1
      %p120 = por %p118, %p119
      %p121 = scmp.ne.s32.totalorder %s110, %s111
      %p122 = scmp.eq.s32.totalorder %s21, 0
      %p123 = por %p121, %p122
      %p124 = scmp.ne.s32.totalorder %s110, %s111
      %p125 = scmp.eq.s32.totalorder %s22, 1
      %p126 = por %p124, %p125
      %p128 = scmp.ne.s32.totalorder %s111, %s127
      %p129 = scmp.eq.s32.totalorder %s22, 0
      %p130 = por %p128, %p129
      %s131 = ssub.s32 %s23, %s42
      %s132 = ssub.s32 %s24, %s38
      %s133 = sor.u32 %s131, %s132
      %p134 = scmp.eq.s32.totalorder %s133, 0
      %s136 = sadd.s32 %s135, 1
      %s137 = scalar_select %p134, %s135, %s136
      %p140 = pneg %p134
      %p141 = scmp.eq.s32.totalorder %s16, 1
      %p142 = por %p140, %p141
      %p143 = scmp.ne.s32.totalorder %s135, %s138
      %p144 = scmp.eq.s32.totalorder %s16, 0
      %p145 = por %p143, %p144
      %p146 = scmp.ne.s32.totalorder %s135, %s138
      %p147 = scmp.eq.s32.totalorder %s21, 1
      %p148 = por %p146, %p147
      %p149 = scmp.ne.s32.totalorder %s138, %s139
      %p150 = scmp.eq.s32.totalorder %s21, 0
      %p151 = por %p149, %p150
      %p152 = scmp.ne.s32.totalorder %s138, %s139
      %p153 = scmp.eq.s32.totalorder %s22, 1
      %p154 = por %p152, %p153
      %p156 = scmp.ne.s32.totalorder %s139, %s155
      %p157 = scmp.eq.s32.totalorder %s22, 0
      %p158 = por %p156, %p157
      %p159 = scmp.le.s32.totalorder 1, %s16
      %p160 = scmp.lt.s32.totalorder %s16, 3
      %p161 = pnand %p159, %p160
      %p162 = pneg %p161
      // Predicated region
      $region9: #{tpu_custom_call.1} parent=5 // pred_check
        _
      $region10: #{tpu_custom_call.1} parent=5 // pred_check_branch
        %164 = sbr.rel (%p161) target = $region12
      $region11: #{tpu_custom_call.1} parent=5 // pred_region
        %s165 = ssub.s32 %s16, 1
      $region12: #{tpu_custom_call.1} parent=5 // pred_fallthru
        _
      %p166 = scmp.lt.s32.totalorder %s16, 2
      // Predicated region
      $region13: #{tpu_custom_call.1} parent=5 // pred_check
        %p167 = pneg %p166
      $region14: #{tpu_custom_call.1} parent=5 // pred_check_branch
        %169 = sbr.rel (%p167) target = $region16
      $region15: #{tpu_custom_call.1} parent=5 // pred_region
        // Predicated region
        $region17: #{tpu_custom_call.1} parent=15 // pred_check
          %p170 = pneg %p59
        $region18: #{tpu_custom_call.1} parent=15 // pred_check_branch
          %172 = sbr.rel (%p170) target = $region20
        $region19: #{tpu_custom_call.1} parent=15 // pred_region
          %s173 = sadd.s32 %s24, %s25
          %s174 = smul.u32 2, %s173
          %p175 = scmp.lt.s32.totalorder %s23, 1
          %s176 = scalar_select %p175, %s23, 1
          %p177 = scmp.lt.s32.totalorder %s174, 1
          %s178 = scalar_select %p177, %s174, 1
          %s179 = smul.addr %s176, 2
          %s180 = sadd.s32 %s178, %s179
          %s181 = smul.addr %s180, 8
          %s182 = scalar_lea.vmem %s0, %s181
          %s183 = sadd.s32 %s24, %s25
          %s184 = smul.u32 2, %s183
        $region20: #{tpu_custom_call.1} parent=15 // pred_fallthru
          _
        // Predicated region
        $region21: #{tpu_custom_call.1} parent=15 // pred_check
          %p185 = pneg %p89
        $region22: #{tpu_custom_call.1} parent=15 // pred_check_branch
          %187 = sbr.rel (%p185) target = $region24
        $region23: #{tpu_custom_call.1} parent=15 // pred_region
          %s188 = sadd.s32 %s24, %s25
          %s189 = smul.u32 2, %s188
          %p190 = scmp.lt.s32.totalorder %s23, 1
          %s191 = scalar_select %p190, %s23, 1
          %p192 = scmp.lt.s32.totalorder %s189, 1
          %s193 = scalar_select %p192, %s189, 1
          %s194 = smul.addr %s191, 2
          %s195 = sadd.s32 %s193, %s194
          %s196 = scalar_lea.vmem %s1, %s195
          %s197 = sadd.s32 %s24, %s25
          %s198 = smul.u32 2, %s197
        $region24: #{tpu_custom_call.1} parent=15 // pred_fallthru
          _
      $region16: #{tpu_custom_call.1} parent=5 // pred_fallthru
        _
      %p199 = scmp.le.s32.totalorder 1, %s16
      %p200 = scmp.lt.s32.totalorder %s16, 3
      %p201 = pnand %p199, %p200
      %p202 = pneg %p201
      // Predicated region
      $region25: #{tpu_custom_call.1} parent=5 // pred_check
        _
      $region26: #{tpu_custom_call.1} parent=5 // pred_check_branch
        %204 = sbr.rel (%p201) target = $region28
      $region27: #{tpu_custom_call.1} parent=5 // pred_region
        %s205 = ssub.s32 %s16, 1
        %s206 = sadd.s32 %s27, %s28
        %s207 = smul.u32 2, %s206
        %p208 = scmp.lt.s32.totalorder %s26, 1
        %s209 = scalar_select %p208, %s26, 1
        %p210 = scmp.lt.s32.totalorder %s207, 1
        %s211 = scalar_select %p210, %s207, 1
        %s212 = smul.addr %s209, 2
        %s213 = sadd.s32 %s211, %s212
        %s214 = smul.addr %s213, 8
        %s215 = scalar_lea.vmem %s0, %s214
        %p216 = pneg %p65
        %p217 = pneg %p62
        %s218 = sadd.s32 %s27, %s28
        %s219 = smul.u32 2, %s218
        %p220 = scmp.lt.s32.totalorder %s26, 1
        %s221 = scalar_select %p220, %s26, 1
        %p222 = scmp.lt.s32.totalorder %s219, 1
        %s223 = scalar_select %p222, %s219, 1
        %s224 = smul.addr %s221, 2
        %s225 = sadd.s32 %s223, %s224
        %s226 = scalar_lea.vmem %s1, %s225
        %p227 = pneg %p95
        %p228 = pneg %p92
        %p229 = pneg %p123
        %p230 = pneg %p120
        %s231 = sand.u32 %s110, 1
        %s232 = scalar_lea.sflag [#allocation3], %s231
        %s233 = sand.u32 %s110, 1
        %s234 = smul.addr %s233, 2
        %s235 = scalar_lea.vmem [#allocation2], %s234
        %p236 = pneg %p151
        %p237 = pneg %p148
        %s238 = sand.u32 %s138, 1
        %s239 = scalar_lea.sflag [#allocation5], %s238
        %s240 = sand.u32 %s138, 1
        %s241 = smul.addr %s240, 2
        %s242 = scalar_lea.vmem [#allocation4], %s241
        %s243 = sadd.s32 %s27, %s28
        %s244 = smul.u32 2, %s243
        %p245 = scmp.lt.s32.totalorder %s26, 1
        %s246 = scalar_select %p245, %s26, 1
        %p247 = scmp.lt.s32.totalorder %s244, 1
        %s248 = scalar_select %p247, %s244, 1
        %s249 = smul.addr %s246, 2
        %s250 = sadd.s32 %s248, %s249
        %s251 = smul.addr %s250, 8
        %s252 = scalar_lea.vmem %s0, %s251
        %s253 = sadd.s32 %s27, %s28
        %s254 = smul.u32 2, %s253
        %s255 = sadd.s32 %s27, %s28
        %s256 = smul.u32 2, %s255
        %p257 = scmp.lt.s32.totalorder %s26, 1
        %s258 = scalar_select %p257, %s26, 1
        %p259 = scmp.lt.s32.totalorder %s256, 1
        %s260 = scalar_select %p259, %s256, 1
        %s261 = smul.addr %s258, 2
        %s262 = sadd.s32 %s260, %s261
        %s263 = scalar_lea.vmem %s1, %s262
        %s264 = sadd.s32 %s27, %s28
        %s265 = smul.u32 2, %s264
        %p266 = scmp.eq.s32.totalorder %s28, 0
        // Predicated region
        $region29: #{tpu_custom_call.1} parent=27 // pred_check
          %p267 = pneg %p266
        $region30: #{tpu_custom_call.1} parent=27 // pred_check_branch
          %269 = sbr.rel (%p267) target = $region32
        $region31: #{tpu_custom_call.1} parent=27 // pred_region
          %v270 = vlaneseq
          %vm271 = vcmp.ge.s32.totalorder %v270, 0
          %vm272 = vcmp.lt.s32.totalorder %v270, 256
          %vm273 = vmand %vm271, %vm272
          %274 = vst.msk [vmem:[%s235] sm:$0x3] %vm273, 0.0
          %275 = vst.msk [vmem:[%s242] sm:$0x3] %vm273, 0.0
        $region32: #{tpu_custom_call.1} parent=27 // pred_fallthru
          _
        %v276 = vld [vmem:[%s252] sm:$0x3f]
        %v277 = vld [vmem:[%s252 + $0x8] sm:$0x3f]
        %v278 = vld [vmem:[%s263] sm:$0x3]
        %vm279 = vcmask 1045504
        %v280 = vsel %vm279, %v276, -inf
        %v281 = vrot.slane %v280, 4
        %v282 = vmax.f32 %v280, %v281
        %v283 = vrot.slane %v282, 2
        %v284 = vmax.f32 %v282, %v283
        %v285 = vrot.slane %v284, 1
        %v286 = vmax.f32 %v284, %v285
        %v287 = vsel %vm279, %v277, -inf
        %v288 = vrot.slane %v287, 4
        %v289 = vmax.f32 %v287, %v288
        %v290 = vrot.slane %v289, 2
        %v291 = vmax.f32 %v289, %v290
        %v292 = vrot.slane %v291, 1
        %v293 = vmax.f32 %v291, %v292
        %v294 = vsub.f32 %v276, %v286
        %v295 = vsub.f32 %v277, %v293
        %v296 = vmul.f32 %v294, 1.442695
        %v297 = vpow.pop %v296
        %v298 = vmul.f32 %v295, 1.442695
        %v299 = vpow.pop %v298
        %v300 = vsel %vm279, %v297, 0.0
        %v301 = vrot.slane %v300, 4
        %v302 = vadd.f32 %v300, %v301
        %v303 = vrot.slane %v302, 2
        %v304 = vadd.f32 %v302, %v303
        %v305 = vrot.slane %v304, 1
        %v306 = vadd.f32 %v304, %v305
        %v307 = vsel %vm279, %v299, 0.0
        %v308 = vrot.slane %v307, 4
        %v309 = vadd.f32 %v307, %v308
        %v310 = vrot.slane %v309, 2
        %v311 = vadd.f32 %v309, %v310
        %v312 = vrot.slane %v311, 1
        %v313 = vadd.f32 %v311, %v312
        %v314 = vlog2.pop %v306
        %v315 = vmul.f32 %v314, 0.6931472
        %v316 = vlog2.pop %v313
        %v317 = vmul.f32 %v316, 0.6931472
        %v318 = vadd.f32 %v286, %v315
        %v319 = vadd.f32 %v293, %v317
        %v320 = vlaneseq
        %v321 = vshrl.u32 %v320, 7
        %v322 = vperm.slane %v278, 0
        %v323 = vperm.slane %v278, 1
        %vm324 = vcmp.eq.s32.totalorder %v321, %v322
        %vm325 = vcmp.eq.s32.totalorder %v321, %v323
        %v326 = vsel %vm324, %v276, 0.0
        %v327 = vsel %vm325, %v277, 0.0
        %v328 = vsel %vm279, %v326, 0.0
        %v329 = vrot.slane %v328, 4
        %v330 = vadd.f32 %v328, %v329
        %v331 = vrot.slane %v330, 2
        %v332 = vadd.f32 %v330, %v331
        %v333 = vrot.slane %v332, 1
        %v334 = vadd.f32 %v332, %v333
        %v335 = vsel %vm279, %v327, 0.0
        %v336 = vrot.slane %v335, 4
        %v337 = vadd.f32 %v335, %v336
        %v338 = vrot.slane %v337, 2
        %v339 = vadd.f32 %v337, %v338
        %v340 = vrot.slane %v339, 1
        %v341 = vadd.f32 %v339, %v340
        %v342 = vsub.f32 %v318, %v334
        %v343 = vsub.f32 %v319, %v341
        %vm344 = vcmp.ne.s32.totalorder %v278, 255
        %v345 = vld [vmem:[%s235] sm:$0x3]
        %v348 = vrot.slane %v343, 7
        %vm349 = vcmask 1040384
        %v350 = vsel %vm349, %v342, %v348
        %v352 = vsel %vm344, %v350, 0.0
        %v353 = vadd.f32 %v345, %v352
        %v354 = vlaneseq
        %vm355 = vcmp.ge.s32.totalorder %v354, 0
        %vm356 = vcmp.lt.s32.totalorder %v354, 256
        %vm357 = vmand %vm355, %vm356
        %358 = vst.msk [vmem:[%s235] sm:$0x3] %vm357, %v353
        %v359 = vld [vmem:[%s242] sm:$0x3]
        %v360 = vsel %vm344, 1, 0
        %v361 = vcvt.s32.f32 %v360
        %v362 = vadd.f32 %v359, %v361
        %363 = vst.msk [vmem:[%s242] sm:$0x3] %vm357, %v362
        %s364 = sand.u32 %s110, 1
        %s365 = scalar_lea.sflag [#allocation3], %s364
        %s366 = sand.u32 %s110, 1
        %s367 = smul.addr %s366, 2
        %s368 = scalar_lea.vmem [#allocation2], %s367
        %s369 = sand.u32 %s138, 1
        %s370 = scalar_lea.sflag [#allocation5], %s369
        %s371 = sand.u32 %s138, 1
        %s372 = smul.addr %s371, 2
        %s373 = scalar_lea.vmem [#allocation4], %s372
        // Predicated region
        $region33: #{tpu_custom_call.1} parent=27 // pred_check
          %p374 = pneg %p120
        $region34: #{tpu_custom_call.1} parent=27 // pred_check_branch
          %376 = sbr.rel (%p374) target = $region36
        $region35: #{tpu_custom_call.1} parent=27 // pred_region
          %378 = vsyncadd %s365, 0
          %s379 = smul.addr %s27, 2
          %s380 = smul.addr %s26, 2
          %s381 = sadd.s32 %s379, %s380
          %s382 = scalar_lea.hbm %s2, %s381
          %s384 = sshll.u32 %s368, 4
          %s385 = int_to_ptr.vmem [resolvable:$true] %s384
          %s386 = sshll.u32 %s382, 4
          %s387 = int_to_ptr.hbm [resolvable:$true] %s386
          %389 = dma.vmem_to_hbm [thread:$0]  %s385, 32, %s387, %s365
        $region36: #{tpu_custom_call.1} parent=27 // pred_fallthru
          _
        // Predicated region
        $region37: #{tpu_custom_call.1} parent=27 // pred_check
          %p390 = pneg %p148
        $region38: #{tpu_custom_call.1} parent=27 // pred_check_branch
          %392 = sbr.rel (%p390) target = $region40
        $region39: #{tpu_custom_call.1} parent=27 // pred_region
          %394 = vsyncadd %s370, 0
          %s395 = smul.addr %s27, 2
          %s396 = smul.addr %s26, 2
          %s397 = sadd.s32 %s395, %s396
          %s398 = scalar_lea.hbm %s3, %s397
          %s400 = sshll.u32 %s373, 4
          %s401 = int_to_ptr.vmem [resolvable:$true] %s400
          %s402 = sshll.u32 %s398, 4
          %s403 = int_to_ptr.hbm [resolvable:$true] %s402
          %405 = dma.vmem_to_hbm [thread:$0]  %s401, 32, %s403, %s370
        $region40: #{tpu_custom_call.1} parent=27 // pred_fallthru
          _
      $region28: #{tpu_custom_call.1} parent=5 // pred_fallthru
        _
      %p406 = scmp.le.s32.totalorder 2, %s16
      // Predicated region
      $region41: #{tpu_custom_call.1} parent=5 // pred_check
        %p407 = pneg %p406
      $region42: #{tpu_custom_call.1} parent=5 // pred_check_branch
        %409 = sbr.rel (%p407) target = $region44
      $region43: #{tpu_custom_call.1} parent=5 // pred_region
        %s410 = ssub.s32 %s16, 2
        // Predicated region
        $region45: #{tpu_custom_call.1} parent=43 // pred_check
          %p411 = pneg %p126
        $region46: #{tpu_custom_call.1} parent=43 // pred_check_branch
          %413 = sbr.rel (%p411) target = $region48
        $region47: #{tpu_custom_call.1} parent=43 // pred_region
          %s414 = sand.u32 %s111, 1
          %s415 = scalar_lea.sflag [#allocation3], %s414
          %s416 = sand.u32 %s111, 1
          %s417 = smul.addr %s416, 2
          %s418 = scalar_lea.vmem [#allocation2], %s417
          %420 = dma.done %s415, 32
        $region48: #{tpu_custom_call.1} parent=43 // pred_fallthru
          _
        // Predicated region
        $region49: #{tpu_custom_call.1} parent=43 // pred_check
          %p421 = pneg %p154
        $region50: #{tpu_custom_call.1} parent=43 // pred_check_branch
          %423 = sbr.rel (%p421) target = $region52
        $region51: #{tpu_custom_call.1} parent=43 // pred_region
          %s424 = sand.u32 %s139, 1
          %s425 = scalar_lea.sflag [#allocation5], %s424
          %s426 = sand.u32 %s139, 1
          %s427 = smul.addr %s426, 2
          %s428 = scalar_lea.vmem [#allocation4], %s427
          %430 = dma.done %s425, 32
        $region52: #{tpu_custom_call.1} parent=43 // pred_fallthru
          _
      $region44: #{tpu_custom_call.1} parent=5 // pred_fallthru
        _
    $region6: #{tpu_custom_call.1} parent=1 // loop_footer
      %s20 = sadd.s32 1, %s16
    $region7: #{tpu_custom_call.1} parent=1 // loop_footer_branch
      %15 = sbr.rel target = $region3
    $region8: #{tpu_custom_call.1} parent=1 // loop_exit
      _
    %431 = vsyncpa [#allocation3], 1
    %s432 = scalar_lea.sflag [#allocation3], 1
    %433 = vsyncpa %s432, 1
    %434 = vsyncpa [#allocation5], 1
    %s435 = scalar_lea.sflag [#allocation5], 1
    %436 = vsyncpa %s435, 1

</llo_original>
